<compile_context>
chip_gen: v5e
topology: v5e:2x2
jax: 0.10.0
libtpu: 0.0.40
codegen_flags: <defaults>
</compile_context>

<pallas_src>
import jax
import jax.numpy as jnp
from jax import lax
from jax.experimental import pallas as pl
from jax.experimental.pallas import tpu as pltpu

LANES = 128
TILE_ROWS_MAX = 8192                 # (8192, 128) f32 tile = 4 MiB per input per buffer
VMEM_LIMIT_BYTES = 32 * 1024 * 1024  # 16 MiB of double-buffered inputs + headroom; <= physical on v5e/v6e/v7x


def _make_kernel(rows, tile_rows):
    """rows / tile_rows are static Python ints (closed over)."""
    fold = (tile_rows % 8 == 0)      # big tiles: fold to an (8,128) vreg accumulator

    def reduce_tile(x):
        if fold:
            # (tile_rows, 128) -> (tile_rows//8, 8, 128) is a leading-dim split
            # (no relayout); the axis-0 sum is pure VPU vreg adds, no XLU.
            return jnp.sum(x.reshape(tile_rows // 8, 8, LANES), axis=0)
        return jnp.sum(x, axis=0, keepdims=True)

    def kernel(o_ref, l_ref, out_ref, acc_ref):
        i = pl.program_id(0)

        @pl.when(i == 0)
        def _():
            acc_ref[...] = jnp.zeros_like(acc_ref)

        o = o_ref[...].astype(jnp.float32)
        l = l_ref[...].astype(jnp.float32)
        ape = jnp.abs((o - l) / l)

        valid = rows - i * tile_rows          # rows of this block that are real data

        # Fast path: interior (full) tiles - no iota / compare / select at all.
        @pl.when(valid >= tile_rows)
        def _():
            acc_ref[...] += reduce_tile(ape)

        # Slow path: the single ragged edge tile.  Rows past `valid` hold
        # whatever Pallas padded the block with; the post-divide select zeroes
        # them (select does not propagate NaN/inf from the unselected branch).
        @pl.when(valid < tile_rows)
        def _():
            rid = lax.broadcasted_iota(jnp.int32, (tile_rows, LANES), 0)
            acc_ref[...] += reduce_tile(jnp.where(rid < valid, ape, 0.0))

        @pl.when(i == pl.num_programs(0) - 1)
        def _():
            out_ref[...] = jnp.sum(acc_ref[...], axis=0, keepdims=True)

    acc_shape = (8, LANES) if fold else (1, LANES)
    return kernel, acc_shape


def _native_stream_dtype(x):
    # Stream f32 / bf16 as-is (no HBM upcast pass); anything else goes through
    # f32.  TODO(synk): float64 inputs are computed in f32 (TPU-native).
    if x.dtype in (jnp.float32, jnp.bfloat16):
        return x
    return x.astype(jnp.float32)


def _mape_sum_slab(o2, l2, rows, tile_rows):
    """Sum of |(o - l) / l| over a (rows, 128) lane-dense slab (f32 result)."""
    num_blocks = pl.cdiv(rows, tile_rows)
    kernel, acc_shape = _make_kernel(rows, tile_rows)

    out = pl.pallas_call(
        kernel,
        out_shape=jax.ShapeDtypeStruct((1, LANES), jnp.float32),
        grid_spec=pltpu.PrefetchScalarGridSpec(
            num_scalar_prefetch=0,
            grid=(num_blocks,),
            in_specs=[
                pl.BlockSpec((tile_rows, LANES), lambda i: (i, 0)),
                pl.BlockSpec((tile_rows, LANES), lambda i: (i, 0)),
            ],
            out_specs=pl.BlockSpec((1, LANES), lambda i: (0, 0)),
            scratch_shapes=[pltpu.VMEM(acc_shape, jnp.float32)],
        ),
        compiler_params=pltpu.CompilerParams(
            dimension_semantics=("arbitrary",),
            vmem_limit_bytes=VMEM_LIMIT_BYTES,
        ),
    )(o2, l2)
    return jnp.sum(out)


def mape_loss(outs, labels, *, tile_rows_max=TILE_ROWS_MAX):
    """Pallas implementation of torch.mean(torch.abs((outs - labels) / labels))."""
    assert outs.shape == labels.shape, "outs / labels must have the same shape"
    n = int(outs.size)
    assert n > 0

    f = _native_stream_dtype(outs).reshape(-1)   # reshape of contiguous arrays: free
    g = _native_stream_dtype(labels).reshape(-1)

    rem = n % LANES
    n_main = n - rem

    # <=127-element lane tail: plain jnp (negligible bytes), no padded copy of
    # the full inputs and no pad-value hygiene inside the kernel.
    tail_sum = jnp.float32(0.0)
    if rem:
        ot = f[n_main:].astype(jnp.float32)
        lt = g[n_main:].astype(jnp.float32)
        tail_sum = jnp.sum(jnp.abs((ot - lt) / lt))

    main_sum = jnp.float32(0.0)
    if n_main:
        # Zero-copy when n % 128 == 0; only the ragged case materializes the
        # leading slice once (review option b).
        fm = f if rem == 0 else f[:n_main]
        gm = g if rem == 0 else g[:n_main]
        rows = n_main // LANES
        tile_rows = tile_rows_max if rows >= tile_rows_max else rows
        main_sum = _mape_sum_slab(
            fm.reshape(rows, LANES), gm.reshape(rows, LANES), rows, tile_rows
        )

    out_dt = jnp.result_type(outs.dtype, labels.dtype)
    if not jnp.issubdtype(out_dt, jnp.floating):
        out_dt = jnp.float32
    return ((main_sum + tail_sum) / jnp.float32(n)).astype(out_dt)


if __name__ == "__main__":
    key = jax.random.PRNGKey(0)
    k1, k2, k3, k4, k5, k6 = jax.random.split(key, 6)

    # Regression-head shaped predictions (WideDeepNet): (batch, 1).
    # n = 256 is a lane multiple -> fully zero-copy kernel path.
    outs = jax.random.normal(k1, (256, 1), dtype=jnp.float32)
    labels = jax.random.uniform(k2, (256, 1), dtype=jnp.float32,
                                minval=0.5, maxval=2.0)
    loss = mape_loss(outs, labels)
    jax.block_until_ready(loss)
    ref = jnp.mean(jnp.abs((outs - labels) / labels))
    assert jnp.allclose(loss, ref, rtol=1e-5, atol=1e-5), (loss, ref)

    # Ragged element count (33*40 = 1320): kernel handles the 1280-element
    # main slab, the 40-element lane tail is folded in with plain jnp.
    outs2 = jax.random.normal(k3, (33, 40), dtype=jnp.float32)
    labels2 = jax.random.uniform(k4, (33, 40), dtype=jnp.float32,
                                 minval=0.5, maxval=2.0)
    loss2 = mape_loss(outs2, labels2)
    jax.block_until_ready(loss2)
    ref2 = jnp.mean(jnp.abs((outs2 - labels2) / labels2))
    assert jnp.allclose(loss2, ref2, rtol=1e-4, atol=1e-5), (loss2, ref2)

    # Multi-block + ragged-edge-block path (small tile override so shapes stay
    # tiny): 100 rows with 8-row tiles -> 13 grid steps, last one masked.
    outs3 = jax.random.normal(k5, (100, 128), dtype=jnp.float32)
    labels3 = jax.random.uniform(k6, (100, 128), dtype=jnp.float32,
                                 minval=0.5, maxval=2.0)
    loss3 = mape_loss(outs3, labels3, tile_rows_max=8)
    jax.block_until_ready(loss3)
    ref3 = jnp.mean(jnp.abs((outs3 - labels3) / labels3))
    assert jnp.allclose(loss3, ref3, rtol=1e-4, atol=1e-5), (loss3, ref3)

    print("KERNEL_OK")
</pallas_src>

<mosaic_0001>
module attributes {stable_mosaic.version = 11 : i64} {
  func.func @kernel(%arg0: i32, %arg1: memref<2x128xf32, #tpu.memory_space<vmem>>, %arg2: memref<2x128xf32, #tpu.memory_space<vmem>>, %arg3: memref<1x128xf32, #tpu.memory_space<vmem>>, %arg4: memref<1x128xf32, #tpu.memory_space<vmem>>) attributes {dimension_semantics = [#tpu.dimension_semantics<arbitrary>], iteration_bounds = array<i64: 1>, scalar_prefetch = 0 : i64, scratch_operands = 1 : i64, tpu.core_type = #tpu.core_type<tc>, window_params = [{transform_indices = @transform_0, window_bounds = array<i64: 2, 128>}, {transform_indices = @transform_1, window_bounds = array<i64: 2, 128>}, {pipeline_mode = #tpu.pipeline_mode<synchronous>, transform_indices = @transform_2, window_bounds = array<i64: 1, 128>}]} {
    %c0_i32 = arith.constant 0 : i32
    %0 = arith.cmpi eq, %arg0, %c0_i32 : i32
    %1 = arith.extui %0 : i1 to i32
    %c0_i32_0 = arith.constant 0 : i32
    %2 = arith.cmpi ne, %1, %c0_i32_0 : i32
    scf.if %2 {
      %cst = arith.constant 0.000000e+00 : f32
      %19 = vector.broadcast %cst : f32 to vector<1x128xf32>
      %c0_11 = arith.constant 0 : index
      %c0_12 = arith.constant 0 : index
      %20 = vector.load %arg4[%c0_11, %c0_12] : memref<1x128xf32, #tpu.memory_space<vmem>>, vector<1x128xf32>
      tpu.vector_store %arg4[%c0_11, %c0_12], %19 {strides = array<i32>} : memref<1x128xf32, #tpu.memory_space<vmem>>, vector<1x128xf32>,
    } else {
    }
    %c0 = arith.constant 0 : index
    %c0_1 = arith.constant 0 : index
    %3 = vector.load %arg1[%c0, %c0_1] : memref<2x128xf32, #tpu.memory_space<vmem>>, vector<2x128xf32>
    %c0_2 = arith.constant 0 : index
    %c0_3 = arith.constant 0 : index
    %4 = vector.load %arg2[%c0_2, %c0_3] : memref<2x128xf32, #tpu.memory_space<vmem>>, vector<2x128xf32>
    %5 = arith.subf %3, %4 : vector<2x128xf32>
    %6 = arith.divf %5, %4 : vector<2x128xf32>
    %7 = math.absf %6 : vector<2x128xf32>
    %c2_i32 = arith.constant 2 : i32
    %8 = arith.muli %arg0, %c2_i32 : i32
    %c2_i32_4 = arith.constant 2 : i32
    %9 = arith.subi %c2_i32_4, %8 : i32
    %c2_i32_5 = arith.constant 2 : i32
    %10 = arith.cmpi sge, %9, %c2_i32_5 : i32
    %11 = arith.extui %10 : i1 to i32
    %c0_i32_6 = arith.constant 0 : i32
    %12 = arith.cmpi ne, %11, %c0_i32_6 : i32
    scf.if %12 {
      %c0_11 = arith.constant 0 : index
      %c0_12 = arith.constant 0 : index
      %19 = vector.load %arg4[%c0_11, %c0_12] : memref<1x128xf32, #tpu.memory_space<vmem>>, vector<1x128xf32>
      %cst = arith.constant dense<0.000000e+00> : vector<128xf32>
      %20 = vector.multi_reduction <add>, %7, %cst [0] : vector<2x128xf32> to vector<128xf32>
      %21 = vector.shape_cast %20 : vector<128xf32> to vector<1x128xf32>
      %22 = arith.addf %19, %21 : vector<1x128xf32>
      %c0_13 = arith.constant 0 : index
      %c0_14 = arith.constant 0 : index
      %23 = vector.load %arg4[%c0_13, %c0_14] : memref<1x128xf32, #tpu.memory_space<vmem>>, vector<1x128xf32>
      tpu.vector_store %arg4[%c0_13, %c0_14], %22 {strides = array<i32>} : memref<1x128xf32, #tpu.memory_space<vmem>>, vector<1x128xf32>,
    } else {
    }
    %c2_i32_7 = arith.constant 2 : i32
    %13 = arith.cmpi slt, %9, %c2_i32_7 : i32
    %14 = arith.extui %13 : i1 to i32
    %c0_i32_8 = arith.constant 0 : i32
    %15 = arith.cmpi ne, %14, %c0_i32_8 : i32
    scf.if %15 {
      %19 = tpu.iota {dimensions = array<i32: 0>} : vector<2x128xi32>
      %c0_11 = arith.constant 0 : index
      %c0_12 = arith.constant 0 : index
      %20 = vector.load %arg4[%c0_11, %c0_12] : memref<1x128xf32, #tpu.memory_space<vmem>>, vector<1x128xf32>
      %21 = vector.broadcast %9 : i32 to vector<2x128xi32>
      %22 = arith.cmpi slt, %19, %21 : vector<2x128xi32>
      %cst = arith.constant 0.000000e+00 : f32
      %23 = vector.broadcast %cst : f32 to vector<2x128xf32>
      %24 = arith.select %22, %7, %23 : vector<2x128xi1>, vector<2x128xf32>
      %cst_13 = arith.constant dense<0.000000e+00> : vector<128xf32>
      %25 = vector.multi_reduction <add>, %24, %cst_13 [0] : vector<2x128xf32> to vector<128xf32>
      %26 = vector.shape_cast %25 : vector<128xf32> to vector<1x128xf32>
      %27 = arith.addf %20, %26 : vector<1x128xf32>
      %c0_14 = arith.constant 0 : index
      %c0_15 = arith.constant 0 : index
      %28 = vector.load %arg4[%c0_14, %c0_15] : memref<1x128xf32, #tpu.memory_space<vmem>>, vector<1x128xf32>
      tpu.vector_store %arg4[%c0_14, %c0_15], %27 {strides = array<i32>} : memref<1x128xf32, #tpu.memory_space<vmem>>, vector<1x128xf32>,
    } else {
    }
    %c0_i32_9 = arith.constant 0 : i32
    %16 = arith.cmpi eq, %arg0, %c0_i32_9 : i32
    %17 = arith.extui %16 : i1 to i32
    %c0_i32_10 = arith.constant 0 : i32
    %18 = arith.cmpi ne, %17, %c0_i32_10 : i32
    scf.if %18 {
      %c0_11 = arith.constant 0 : index
      %c0_12 = arith.constant 0 : index
      %19 = vector.load %arg4[%c0_11, %c0_12] : memref<1x128xf32, #tpu.memory_space<vmem>>, vector<1x128xf32>
      %cst = arith.constant dense<0.000000e+00> : vector<128xf32>
      %20 = vector.multi_reduction <add>, %19, %cst [0] : vector<1x128xf32> to vector<128xf32>
      %21 = vector.shape_cast %20 : vector<128xf32> to vector<1x128xf32>
      %c0_13 = arith.constant 0 : index
      %c0_14 = arith.constant 0 : index
      %22 = vector.load %arg3[%c0_13, %c0_14] : memref<1x128xf32, #tpu.memory_space<vmem>>, vector<1x128xf32>
      tpu.vector_store %arg3[%c0_13, %c0_14], %21 {strides = array<i32>} : memref<1x128xf32, #tpu.memory_space<vmem>>, vector<1x128xf32>,
    } else {
    }
    return
  }
  func.func @transform_0(%arg0: i32) -> (i32, i32) {
    %c0_i32 = arith.constant 0 : i32
    %c0_i32_0 = arith.constant 0 : i32
    return %arg0, %c0_i32 : i32, i32
  }
  func.func @transform_1(%arg0: i32) -> (i32, i32) {
    %c0_i32 = arith.constant 0 : i32
    %c0_i32_0 = arith.constant 0 : i32
    return %arg0, %c0_i32 : i32, i32
  }
  func.func @transform_2(%arg0: i32) -> (i32, i32) {
    %c0_i32 = arith.constant 0 : i32
    %c0_i32_0 = arith.constant 0 : i32
    %c0_i32_1 = arith.constant 0 : i32
    return %c0_i32, %c0_i32_0 : i32, i32
  }
}

</mosaic_0001>

<llo_original>
// kernel: tpu_custom_call.1
$region0: #{tpu_custom_call.1}
  #allocation0 [shape = 'u32[]', space=smem, size = 0x4, offset = 0x4, fixed_abs, tag = 'smem constant byte address 0x4 - core index']
  #allocation1 [shape = 'u32[72,128]{1,0:T(1,128)}', space=vmem, size = 0x9000, scoped, tag = 'internal scratch']
  #allocation2 [shape = 'f32[1,128]{1,0:T(1,128)}', space=vmem, size = 0x200, scoped, tag = 'scratch operand']
  %s0 = inlined_call_operand.hbm [shape: f32[2,128], index: 0, kind: input, shape index: {}]
  %s1 = inlined_call_operand.hbm [shape: f32[2,128], index: 1, kind: input, shape index: {}]
  %s2 = inlined_call_operand.hbm [shape: f32[1,128], index: 2, kind: output, shape index: {}]
  %s3 = sld [smem:[#allocation0]]
  $region42: #{tpu_custom_call.1} parent=0
    _
  %s5 = ssub.s32 1, %s3
  %s6 = scalar_select 0, %s5, %s3
  $region1: #{tpu_custom_call.1} parent=0
    #allocation3 [shape = 'u8[1024]{0}', space=vmem, size = 0x400, scoped, tag = 'input window, operand 0, single buffered']
    #allocation4 [shape = 's32[1]{0}', space=sflag, size = 0x4, scoped, tag = 'scoped memory for tpu_custom_call.1']
    #allocation5 [shape = 's32[1]{0}', space=sflag, size = 0x4, scoped, tag = 'scoped memory for tpu_custom_call.1']
    #allocation6 [shape = 'u8[1024]{0}', space=vmem, size = 0x400, scoped, tag = 'input window, operand 1, single buffered']
    #allocation7 [shape = 's32[1]{0}', space=sflag, size = 0x4, scoped, tag = 'scoped memory for tpu_custom_call.1']
    #allocation8 [shape = 'u8[512]{0}', space=vmem, size = 0x400, scoped, tag = 'output window, operand 0, single buffered']
    %7 = vsyncpa [#allocation4], 0
    %8 = vsyncpa [#allocation7], 0
    %9 = vsyncpa [#allocation5], 0
    // Predicated region
    $region2: #{tpu_custom_call.1} parent=1 // pred_check
      _
    $region3: #{tpu_custom_call.1} parent=1 // pred_check_branch
      %11 = sbr.rel (0) target = $region5
    $region4: #{tpu_custom_call.1} parent=1 // pred_region
      %13 = vsyncadd [#allocation4], 0
      %s15 = sshll.u32 %s0, 4
      %s16 = int_to_ptr.hbm [resolvable:$true] %s15
      %s17 = sshll.u32 [#allocation3], 4
      %s18 = int_to_ptr.vmem [resolvable:$true] %s17
      %20 = dma.hbm_to_vmem [thread:$0]  %s16, 32, %s18, [#allocation4]
    $region5: #{tpu_custom_call.1} parent=1 // pred_fallthru
      _
    // Predicated region
    $region6: #{tpu_custom_call.1} parent=1 // pred_check
      _
    $region7: #{tpu_custom_call.1} parent=1 // pred_check_branch
      %22 = sbr.rel (0) target = $region9
    $region8: #{tpu_custom_call.1} parent=1 // pred_region
      %24 = vsyncadd [#allocation7], 0
      %s26 = sshll.u32 %s1, 4
      %s27 = int_to_ptr.hbm [resolvable:$true] %s26
      %s28 = sshll.u32 [#allocation6], 4
      %s29 = int_to_ptr.vmem [resolvable:$true] %s28
      %31 = dma.hbm_to_vmem [thread:$0]  %s27, 32, %s29, [#allocation7]
    $region9: #{tpu_custom_call.1} parent=1 // pred_fallthru
      _
    // Predicated region
    $region10: #{tpu_custom_call.1} parent=1 // pred_check
      _
    $region11: #{tpu_custom_call.1} parent=1 // pred_check_branch
      %33 = sbr.rel (0) target = $region13
    $region12: #{tpu_custom_call.1} parent=1 // pred_region
      %35 = dma.done [#allocation4], 32
    $region13: #{tpu_custom_call.1} parent=1 // pred_fallthru
      _
    // Predicated region
    $region14: #{tpu_custom_call.1} parent=1 // pred_check
      _
    $region15: #{tpu_custom_call.1} parent=1 // pred_check_branch
      %37 = sbr.rel (0) target = $region17
    $region16: #{tpu_custom_call.1} parent=1 // pred_region
      %39 = dma.done [#allocation7], 32
    $region17: #{tpu_custom_call.1} parent=1 // pred_fallthru
      _
    %p40 = scmp.eq.s32.totalorder 0, 0
    // Predicated region
    $region18: #{tpu_custom_call.1} parent=1 // pred_check
      %p41 = pneg %p40
    $region19: #{tpu_custom_call.1} parent=1 // pred_check_branch
      %43 = sbr.rel (%p41) target = $region21
    $region20: #{tpu_custom_call.1} parent=1 // pred_region
      %44 = vst [vmem:[#allocation2] sm:$0x1] 0.0
    $region21: #{tpu_custom_call.1} parent=1 // pred_fallthru
      _
    %v45 = vld [vmem:[#allocation3] sm:$0x3]
    %v46 = vld [vmem:[#allocation6] sm:$0x3]
    %v47 = vsub.f32 %v45, %v46
    %v48 = vrcp.pop %v46
    %v49 = vmul.f32 %v46, %v48
    %v50 = vsub.f32 1.0, %v49
    %v51 = vmul.f32 %v48, %v50
    %v52 = vadd.f32 %v48, %v51
    %vm53 = vweird.f32 %v46
    %vm54 = vweird.f32 %v48
    %vm55 = vmor %vm53, %vm54
    %v56 = vsel %vm55, %v48, %v52
    %v57 = vand.u32 2147483647, %v46
    %vm58 = vcmp.eq.f32.partialorder %v57, 8.507059e+37
    %v59 = vand.u32 %v46, 2147483648
    %v60 = vor.u32 1.1754944e-38, %v59
    %v61 = vsel %vm58, %v60, %v56
    %v62 = vmul.f32 %v47, %v61
    %v63 = vand.u32 2147483647, %v62
    %s64 = smul.u32 0, 2
    %s65 = ssub.s32 2, %s64
    %p66 = scmp.ge.s32.totalorder %s65, 2
    // Predicated region
    $region22: #{tpu_custom_call.1} parent=1 // pred_check
      %p67 = pneg %p66
    $region23: #{tpu_custom_call.1} parent=1 // pred_check_branch
      %69 = sbr.rel (%p67) target = $region25
    $region24: #{tpu_custom_call.1} parent=1 // pred_region
      %v70 = vld [vmem:[#allocation2] sm:$0x1]
      %vm71 = vcmask 1041408
      %v72 = vsel %vm71, %v63, 0.0
      %v73 = vrot.slane %v72, 4
      %v74 = vadd.f32 %v72, %v73
      %v75 = vrot.slane %v74, 2
      %v76 = vadd.f32 %v74, %v75
      %v77 = vrot.slane %v76, 1
      %v78 = vadd.f32 %v76, %v77
      %v79 = vadd.f32 %v70, %v78
      %80 = vst [vmem:[#allocation2] sm:$0x1] %v79
    $region25: #{tpu_custom_call.1} parent=1 // pred_fallthru
      _
    %p81 = scmp.lt.s32.totalorder %s65, 2
    // Predicated region
    $region26: #{tpu_custom_call.1} parent=1 // pred_check
      %p82 = pneg %p81
    $region27: #{tpu_custom_call.1} parent=1 // pred_check_branch
      %84 = sbr.rel (%p82) target = $region29
    $region28: #{tpu_custom_call.1} parent=1 // pred_region
      %v85 = vlaneseq
      %v86 = vshrl.u32 %v85, 7
      %v87 = vld [vmem:[#allocation2] sm:$0x1]
      %v88 = vstv %s65
      %vm89 = vcmp.lt.s32.totalorder %v86, %v88
      %v90 = vsel %vm89, %v63, 0.0
      %vm91 = vcmask 1041408
      %v92 = vsel %vm91, %v90, 0.0
      %v93 = vrot.slane %v92, 4
      %v94 = vadd.f32 %v92, %v93
      %v95 = vrot.slane %v94, 2
      %v96 = vadd.f32 %v94, %v95
      %v97 = vrot.slane %v96, 1
      %v98 = vadd.f32 %v96, %v97
      %v99 = vadd.f32 %v87, %v98
      %100 = vst [vmem:[#allocation2] sm:$0x1] %v99
    $region29: #{tpu_custom_call.1} parent=1 // pred_fallthru
      _
    // Predicated region
    $region30: #{tpu_custom_call.1} parent=1 // pred_check
      %p101 = pneg %p40
    $region31: #{tpu_custom_call.1} parent=1 // pred_check_branch
      %103 = sbr.rel (%p101) target = $region33
    $region32: #{tpu_custom_call.1} parent=1 // pred_region
      %v104 = vld [vmem:[#allocation2] sm:$0x1]
      %v105 = vadd.f32 %v104, 0.0
      %106 = vst [vmem:[#allocation8] sm:$0x1] %v105
    $region33: #{tpu_custom_call.1} parent=1 // pred_fallthru
      _
    // Predicated region
    $region34: #{tpu_custom_call.1} parent=1 // pred_check
      _
    $region35: #{tpu_custom_call.1} parent=1 // pred_check_branch
      %108 = sbr.rel (0) target = $region37
    $region36: #{tpu_custom_call.1} parent=1 // pred_region
      %110 = vsyncadd [#allocation5], 0
      %s112 = sshll.u32 [#allocation8], 4
      %s113 = int_to_ptr.vmem [resolvable:$true] %s112
      %s114 = sshll.u32 %s2, 4
      %s115 = int_to_ptr.hbm [resolvable:$true] %s114
      %117 = dma.vmem_to_hbm [thread:$0]  %s113, 16, %s115, [#allocation5]
    $region37: #{tpu_custom_call.1} parent=1 // pred_fallthru
      _
    // Predicated region
    $region38: #{tpu_custom_call.1} parent=1 // pred_check
      _
    $region39: #{tpu_custom_call.1} parent=1 // pred_check_branch
      %119 = sbr.rel (0) target = $region41
    $region40: #{tpu_custom_call.1} parent=1 // pred_region
      %121 = dma.done [#allocation5], 16
    $region41: #{tpu_custom_call.1} parent=1 // pred_fallthru
      _
    %122 = vsyncpa [#allocation4], 1
    %123 = vsyncpa [#allocation7], 1
    %124 = vsyncpa [#allocation5], 1

</llo_original>
